<compile_context>
chip_gen: v7x
topology: tpu7x:2x2x1
jax: 0.10.0
libtpu: 0.0.40
codegen_flags: <defaults>
</compile_context>

<pallas_src>
import functools

import jax
import jax.numpy as jnp
from jax import lax
from jax.experimental import pallas as pl
from jax.experimental.pallas import tpu as pltpu


def _round_up(x, m):
    return (x + m - 1) // m * m


# Per-generation VMEM budget: ~75% of physical (96 MiB on 128 MiB v5e/v6e,
# 48 MiB on v7x's 64 MiB per-TC VMEM).
try:
    _VMEM_CAP = int(pltpu.get_tpu_info().vmem_capacity_bytes)
except Exception:  # pragma: no cover - interpret mode / older jax
    _VMEM_CAP = 64 * 1024 * 1024
_VMEM_LIMIT = min(_VMEM_CAP * 3 // 4, 100 * 1024 * 1024)
_BIG_VMEM = _VMEM_CAP >= 96 * 1024 * 1024


def _pick_tile(dim, target, align):
    """Largest multiple of `align` that evenly divides `dim` and is <= target.
    Returns the full dim when dim <= target."""
    if dim <= target:
        return dim
    t = (target // align) * align
    while t >= align:
        if dim % t == 0:
            return t
        t -= align
    # TODO(synk): pad + mask the final tile for pathological (prime-ish) dims
    # instead of falling back to an untiled block.
    return dim


# ----------------------------------------------------------------------------
# Tiled linear kernel: y = x @ W + b   (W already transposed to (in, out))
# ----------------------------------------------------------------------------
def _linear_kernel(x_ref, w_ref, b_ref, o_ref, acc_ref):
    @pl.when(pl.program_id(2) == 0)
    def _init():
        acc_ref[...] = jnp.zeros_like(acc_ref)

    acc_ref[...] += jnp.dot(x_ref[...], w_ref[...],
                            preferred_element_type=jnp.float32)

    @pl.when(pl.program_id(2) == pl.num_programs(2) - 1)
    def _store():
        o_ref[...] = (acc_ref[...] + b_ref[...]).astype(o_ref.dtype)


def pallas_linear(x2d, w_t, b, *, out_dtype=jnp.float32, tm=512, tn=512, tk=512):
    """x2d: (M, K); w_t: (K, O) pre-transposed bf16 weight; b: (O,) f32."""
    M, K = x2d.shape
    _, O = w_t.shape
    # M (sublane dim): tile at up to 512, pad M to a tile multiple if needed.
    tm = min(tm, _round_up(M, 8))
    Mp = _round_up(M, tm)
    # O / K (lane dims): largest 128-aligned divisor <= target, else full dim.
    tn = _pick_tile(O, tn, 128)
    tk = _pick_tile(K, tk, 128)

    x_bf = x2d.astype(jnp.bfloat16)
    if Mp != M:
        x_bf = jnp.pad(x_bf, ((0, Mp - M), (0, 0)))
    w_bf = w_t.astype(jnp.bfloat16)
    b2 = b.reshape(1, O).astype(jnp.float32)

    out = pl.pallas_call(
        _linear_kernel,
        out_shape=jax.ShapeDtypeStruct((Mp, O), out_dtype),
        grid=(Mp // tm, O // tn, K // tk),
        in_specs=[
            pl.BlockSpec((tm, tk), lambda i, j, k: (i, k)),
            pl.BlockSpec((tk, tn), lambda i, j, k: (k, j)),
            pl.BlockSpec((1, tn), lambda i, j, k: (0, j)),
        ],
        out_specs=pl.BlockSpec((tm, tn), lambda i, j, k: (i, j)),
        scratch_shapes=[pltpu.VMEM((tm, tn), jnp.float32)],
        compiler_params=pltpu.CompilerParams(
            dimension_semantics=("parallel", "parallel", "arbitrary"),
            vmem_limit_bytes=_VMEM_LIMIT,
        ),
    )(x_bf, w_bf, b2)
    return out[:M] if Mp != M else out


# ----------------------------------------------------------------------------
# Fused cluster-attention kernel: grid = (batch, query-tile).
# Per tile: one MXU matmul for the attn_map output and ONE fused MXU matmul
# mask @ [p*v | p] that yields both the numerator and the denominator.
# ----------------------------------------------------------------------------
def _cattn_kernel(q_ref, k_ref, pv_ref, extra_ref, scc_ref, scr_ref,
                  am_ref, y_ref, *, c, eps):
    q = q_ref[0]                         # (tq, C) bf16, 1/sqrt(d) pre-folded
    k = k_ref[0]                         # (N,  C) bf16

    # attn_map tile = q_scaled @ k^T   (MXU: bf16 in, f32 accumulate)
    s = lax.dot_general(q, k, (((1,), (1,)), ((), ())),
                        preferred_element_type=jnp.float32)        # (tq, N)
    am_ref[0] = s.astype(am_ref.dtype)

    # Block-diagonal cluster mask, built once per tile directly in bf16.
    mask = (scc_ref[0] == scr_ref[0]).astype(jnp.bfloat16)         # (tq, N)

    # Fused numerator + denominator: pv_ref columns are [p*v | p | 0-pad].
    out = jnp.dot(mask, pv_ref[0],
                  preferred_element_type=jnp.float32)              # (tq, CA)
    den = out[:, c:c + 1] + eps                                    # (tq, 1)
    inv = pl.reciprocal(den, approx=True)                          # EUP, not VALU
    # extra = (eps/N) * colsum(v)  (unmasked reference term), precomputed.
    y_ref[0] = ((out[:, :c] + extra_ref[0]) * inv).astype(y_ref.dtype)


# ----------------------------------------------------------------------------
# Parameter init (deterministic, synthetic) — weights stored pre-transposed,
# fused (qk + v) and bf16; attention scale folded into the q columns.
# ----------------------------------------------------------------------------
def init_params(key, dim, pdim, num_head=1):
    assert dim % num_head == 0
    k1, k2, k3, k4, k5 = jax.random.split(key, 5)
    std = 0.02
    scale = (dim // num_head) ** (-0.5)
    w_qk = jax.random.normal(k1, (2 * dim, dim), jnp.float32) * std   # torch (out,in)
    w_v = jax.random.normal(k2, (dim, dim), jnp.float32) * std
    w_proj = jax.random.normal(k4, (dim, dim), jnp.float32) * std
    b_proj = jax.random.normal(k5, (dim,), jnp.float32) * std
    # Fuse to_qk + to_v into one (dim, 3*dim) x@W weight; fold the scale into
    # the q output columns (qkv_bias=False, so no bias to scale).
    w_qkv_t = jnp.concatenate([w_qk, w_v], axis=0).T                  # (dim, 3*dim)
    col_scale = jnp.concatenate([jnp.full((dim,), scale, jnp.float32),
                                 jnp.ones((2 * dim,), jnp.float32)])
    w_qkv_t = w_qkv_t * col_scale[None, :]
    # NOTE: to_pv / pproj weights are intentionally omitted — that path never
    # reaches the returned tensors in the reference forward (dead code).
    # TODO(synk): optionally store fp8 weights on v7x (bf16 activations,
    # f32 accumulation) for ~2x MXU throughput on the projection matmuls.
    _ = (k3, pdim)
    return {
        "num_head": num_head,   # reference never splits heads in the matmuls; only the scale uses it
        "w_qkv_t": w_qkv_t.astype(jnp.bfloat16),
        "b_qkv": jnp.zeros((3 * dim,), jnp.float32),
        "w_proj_t": w_proj.T.astype(jnp.bfloat16),
        "b_proj": b_proj,
    }


# ----------------------------------------------------------------------------
# Forward pass (matches CAttention.forward; attn_drop=proj_drop=0 -> identity)
# ----------------------------------------------------------------------------
@functools.partial(jax.jit, static_argnums=(4,), static_argnames=("attn_map_dtype",))
def cattention_forward(params, x_token, x_path, idx_cluster, cluster_num,
                       eps=1e-6, *, attn_map_dtype=jnp.float32):
    del x_path, cluster_num  # to_pv(x_path) never feeds the outputs; ids assumed in-range
    eps = float(eps)
    B, N, C = x_token.shape

    # Fused q/k/v projection, emitted directly in bf16 (no f32 round trip).
    qkv = pallas_linear(x_token.reshape(B * N, C), params["w_qkv_t"],
                        params["b_qkv"], out_dtype=jnp.bfloat16).reshape(B, N, 3 * C)
    q, k, v = qkv[..., :C], qkv[..., C:2 * C], qkv[..., 2 * C:]       # bf16, q pre-scaled

    # Cluster bookkeeping (glue). jnp.argsort is stable; torch's default sort
    # is not — results match up to tie-breaking inside a cluster.
    idx_shuffle = jnp.argsort(idx_cluster, axis=-1)
    idx_restore = jnp.argsort(idx_shuffle, axis=-1)

    v_shuf = jnp.take_along_axis(v, idx_shuffle[..., None], axis=1)
    # perm2[b, j] = idx_shuffle[b, idx_shuffle[b, j]]  (the two dim=1 gathers)
    perm2 = jnp.take_along_axis(idx_shuffle, idx_shuffle, axis=1)
    q_sel = jnp.take_along_axis(q, perm2[..., None], axis=1)          # (B, N, C)

    # --- Per-batch work hoisted out of the query-tile loop (done ONCE): -----
    # r[b, j] = attn_map[b, perm2[b, j], j];  p = exp(r) (no max-subtraction,
    # exactly as the reference — the +eps/N / +eps terms forbid a shift).
    r = jnp.sum(q_sel.astype(jnp.float32) * k.astype(jnp.float32), axis=-1)   # (B, N)
    p = jnp.exp(r)                                                            # (B, N)
    CA = _round_up(C + 1, 128)   # RHS padded to a 128-lane multiple
    pv = (p[..., None] * v_shuf.astype(jnp.float32)).astype(jnp.bfloat16)     # (B, N, C)
    pv_aug = jnp.concatenate(
        [pv, p.astype(jnp.bfloat16)[..., None],
         jnp.zeros((B, N, CA - C - 1), jnp.bfloat16)], axis=-1)               # (B, N, CA)
    # Unmasked (eps/N) * colsum(v) term of the reference numerator.
    extra = (eps / N) * jnp.sum(v_shuf.astype(jnp.float32), axis=1,
                                keepdims=True)                                # (B, 1, C)

    # Sorted-order cluster ids; mask[i,j] = (sc[i] == sc[j]) == the reference
    # block-diagonal loop (assumes idx_cluster in [0, cluster_num)).
    sc = jnp.take_along_axis(idx_cluster, idx_shuffle, axis=1).astype(jnp.int32)
    sc_col = sc[:, :, None]                                                   # (B, N, 1)
    sc_row = sc[:, None, :]                                                   # (B, 1, N)

    tq = _pick_tile(N, 512 if _BIG_VMEM else 256, 8)
    # On v7x (2 TCs) shard the batch axis so K / pv stay private per core.
    sem = ("parallel", "arbitrary") if B >= 2 else ("arbitrary", "parallel")
    # TODO(synk): single-buffer the per-batch-constant k/pv blocks
    # (pipeline_mode=pl.Buffered(1)) and add a key-dim grid axis for very
    # large N*C on v7x to bound the per-step working set further.
    attn_map, y = pl.pallas_call(
        functools.partial(_cattn_kernel, c=C, eps=eps),
        out_shape=(jax.ShapeDtypeStruct((B, N, N), attn_map_dtype),
                   jax.ShapeDtypeStruct((B, N, C), jnp.bfloat16)),
        grid=(B, N // tq),
        in_specs=[
            pl.BlockSpec((1, tq, C), lambda b, t: (b, t, 0)),    # q tile (scaled)
            pl.BlockSpec((1, N, C), lambda b, t: (b, 0, 0)),     # k
            pl.BlockSpec((1, N, CA), lambda b, t: (b, 0, 0)),    # [p*v | p | pad]
            pl.BlockSpec((1, 1, C), lambda b, t: (b, 0, 0)),     # (eps/N)*colsum(v)
            pl.BlockSpec((1, tq, 1), lambda b, t: (b, t, 0)),    # cluster id per row
            pl.BlockSpec((1, 1, N), lambda b, t: (b, 0, 0)),     # cluster id per col
        ],
        out_specs=(pl.BlockSpec((1, tq, N), lambda b, t: (b, t, 0)),
                   pl.BlockSpec((1, tq, C), lambda b, t: (b, t, 0))),
        compiler_params=pltpu.CompilerParams(
            dimension_semantics=sem,
            vmem_limit_bytes=_VMEM_LIMIT,
        ),
    )(q, k, pv_aug, extra, sc_col, sc_row)

    # (attn @ v).transpose(1, 2).reshape(B, N, C) reproduced verbatim from the
    # 3-D reference (a genuine token/channel scramble when N != C), then the
    # restore gather and the output projection.
    # TODO(synk): fold this transpose + idx_restore gather (and the v_shuf /
    # q_sel gathers above) into the Pallas matmuls via PrefetchScalarGridSpec
    # row-level index_maps to avoid the XLA HBM round trips.
    xt = jnp.transpose(y, (0, 2, 1)).reshape(B, N, C)
    xt = jnp.take_along_axis(xt, idx_restore[..., None], axis=1)
    xt = pallas_linear(xt.reshape(B * N, C), params["w_proj_t"],
                       params["b_proj"], out_dtype=jnp.float32).reshape(B, N, C)
    # attn_drop / proj_drop are Dropout(p=0.0) -> identity.
    return xt, attn_map


if __name__ == "__main__":
    B, N, C, PDIM, CLUSTER_NUM = 2, 16, 32, 16, 4
    key = jax.random.PRNGKey(0)
    kx, kp, kc, kw = jax.random.split(key, 4)

    x_token = jax.random.normal(kx, (B, N, C), jnp.float32)
    x_path = jax.random.normal(kp, (B, N, PDIM), jnp.float32)
    idx_cluster = jax.random.randint(kc, (B, N), 0, CLUSTER_NUM, jnp.int32)
    params = init_params(kw, C, PDIM, num_head=1)

    x_out, attn_map = cattention_forward(
        params, x_token, x_path, idx_cluster, CLUSTER_NUM
    )
    jax.block_until_ready((x_out, attn_map))
    assert x_out.shape == (B, N, C)
    assert attn_map.shape == (B, N, N)
    assert bool(jnp.all(jnp.isfinite(x_out))) and bool(jnp.all(jnp.isfinite(attn_map)))
    print("KERNEL_OK")
</pallas_src>

<mosaic_0001>
module attributes {stable_mosaic.version = 11 : i64} {
  func.func @_linear_kernel(%arg0: i32, %arg1: i32, %arg2: i32, %arg3: memref<32x32xbf16, #tpu.memory_space<vmem>>, %arg4: memref<32x96xbf16, #tpu.memory_space<vmem>>, %arg5: memref<1x96xf32, #tpu.memory_space<vmem>>, %arg6: memref<32x96xbf16, #tpu.memory_space<vmem>>, %arg7: memref<32x96xf32, #tpu.memory_space<vmem>>) attributes {dimension_semantics = [#tpu.dimension_semantics<parallel>, #tpu.dimension_semantics<parallel>, #tpu.dimension_semantics<arbitrary>], iteration_bounds = array<i64: 1, 1, 1>, scalar_prefetch = 0 : i64, scratch_operands = 1 : i64, tpu.core_type = #tpu.core_type<tc>, window_params = [{transform_indices = @transform_0, window_bounds = array<i64: 32, 32>}, {transform_indices = @transform_1, window_bounds = array<i64: 32, 96>}, {transform_indices = @transform_2, window_bounds = array<i64: 1, 96>}, {transform_indices = @transform_3, window_bounds = array<i64: 32, 96>}]} {
    %c0_i32 = arith.constant 0 : i32
    %0 = arith.cmpi eq, %arg2, %c0_i32 : i32
    %1 = arith.extui %0 : i1 to i32
    %c0_i32_0 = arith.constant 0 : i32
    %2 = arith.cmpi ne, %1, %c0_i32_0 : i32
    scf.if %2 {
      %cst_10 = arith.constant 0.000000e+00 : f32
      %12 = vector.broadcast %cst_10 : f32 to vector<32x96xf32>
      %c0_11 = arith.constant 0 : index
      %c0_12 = arith.constant 0 : index
      %13 = vector.load %arg7[%c0_11, %c0_12] : memref<32x96xf32, #tpu.memory_space<vmem>>, vector<32x96xf32>
      tpu.vector_store %arg7[%c0_11, %c0_12], %12 {strides = array<i32>} : memref<32x96xf32, #tpu.memory_space<vmem>>, vector<32x96xf32>,
    } else {
    }
    %c0 = arith.constant 0 : index
    %c0_1 = arith.constant 0 : index
    %3 = vector.load %arg7[%c0, %c0_1] : memref<32x96xf32, #tpu.memory_space<vmem>>, vector<32x96xf32>
    %c0_2 = arith.constant 0 : index
    %c0_3 = arith.constant 0 : index
    %4 = vector.load %arg3[%c0_2, %c0_3] : memref<32x32xbf16, #tpu.memory_space<vmem>>, vector<32x32xbf16>
    %c0_4 = arith.constant 0 : index
    %c0_5 = arith.constant 0 : index
    %5 = vector.load %arg4[%c0_4, %c0_5] : memref<32x96xbf16, #tpu.memory_space<vmem>>, vector<32x96xbf16>
    %cst = arith.constant dense<0.000000e+00> : vector<32x96xf32>
    %6 = tpu.matmul %4, %5, %cst {dimension_numbers = #tpu.dot_dimension_numbers<[1], [0], [0], [1], [0, 0, 1, 1], [], []>} : vector<32x32xbf16>, vector<32x96xbf16>, vector<32x96xf32> -> vector<32x96xf32>
    %7 = arith.addf %3, %6 : vector<32x96xf32>
    %c0_6 = arith.constant 0 : index
    %c0_7 = arith.constant 0 : index
    %8 = vector.load %arg7[%c0_6, %c0_7] : memref<32x96xf32, #tpu.memory_space<vmem>>, vector<32x96xf32>
    tpu.vector_store %arg7[%c0_6, %c0_7], %7 {strides = array<i32>} : memref<32x96xf32, #tpu.memory_space<vmem>>, vector<32x96xf32>,
    %c0_i32_8 = arith.constant 0 : i32
    %9 = arith.cmpi eq, %arg2, %c0_i32_8 : i32
    %10 = arith.extui %9 : i1 to i32
    %c0_i32_9 = arith.constant 0 : i32
    %11 = arith.cmpi ne, %10, %c0_i32_9 : i32
    scf.if %11 {
      %c0_10 = arith.constant 0 : index
      %c0_11 = arith.constant 0 : index
      %12 = vector.load %arg7[%c0_10, %c0_11] : memref<32x96xf32, #tpu.memory_space<vmem>>, vector<32x96xf32>
      %c0_12 = arith.constant 0 : index
      %c0_13 = arith.constant 0 : index
      %13 = vector.load %arg5[%c0_12, %c0_13] : memref<1x96xf32, #tpu.memory_space<vmem>>, vector<1x96xf32>
      %14 = vector.broadcast %13 : vector<1x96xf32> to vector<32x96xf32>
      %15 = arith.addf %12, %14 : vector<32x96xf32>
      %16 = arith.truncf %15 : vector<32x96xf32> to vector<32x96xbf16>
      %c0_14 = arith.constant 0 : index
      %c0_15 = arith.constant 0 : index
      %17 = vector.load %arg6[%c0_14, %c0_15] : memref<32x96xbf16, #tpu.memory_space<vmem>>, vector<32x96xbf16>
      tpu.vector_store %arg6[%c0_14, %c0_15], %16 {strides = array<i32>} : memref<32x96xbf16, #tpu.memory_space<vmem>>, vector<32x96xbf16>,
    } else {
    }
    return
  }
  func.func @transform_0(%arg0: i32, %arg1: i32, %arg2: i32) -> (i32, i32) {
    %c0_i32 = arith.constant 0 : i32
    return %arg0, %arg2 : i32, i32
  }
  func.func @transform_1(%arg0: i32, %arg1: i32, %arg2: i32) -> (i32, i32) {
    %c0_i32 = arith.constant 0 : i32
    return %arg2, %arg1 : i32, i32
  }
  func.func @transform_2(%arg0: i32, %arg1: i32, %arg2: i32) -> (i32, i32) {
    %c0_i32 = arith.constant 0 : i32
    %c0_i32_0 = arith.constant 0 : i32
    return %c0_i32, %arg1 : i32, i32
  }
  func.func @transform_3(%arg0: i32, %arg1: i32, %arg2: i32) -> (i32, i32) {
    %c0_i32 = arith.constant 0 : i32
    return %arg0, %arg1 : i32, i32
  }
}

module attributes {stable_mosaic.version = 11 : i64} {
  func.func @_cattn_kernel(%arg0: i32, %arg1: i32, %arg2: memref<1x16x32xbf16, #tpu.memory_space<vmem>>, %arg3: memref<1x16x32xbf16, #tpu.memory_space<vmem>>, %arg4: memref<1x16x128xbf16, #tpu.memory_space<vmem>>, %arg5: memref<1x1x32xf32, #tpu.memory_space<vmem>>, %arg6: memref<1x16x1xi32, #tpu.memory_space<vmem>>, %arg7: memref<1x1x16xi32, #tpu.memory_space<vmem>>, %arg8: memref<1x16x16xf32, #tpu.memory_space<vmem>>, %arg9: memref<1x16x32xbf16, #tpu.memory_space<vmem>>) attributes {dimension_semantics = [#tpu.dimension_semantics<parallel>, #tpu.dimension_semantics<arbitrary>], iteration_bounds = array<i64: 2, 1>, scalar_prefetch = 0 : i64, scratch_operands = 0 : i64, tpu.core_type = #tpu.core_type<tc>, window_params = [{transform_indices = @transform_0, window_bounds = array<i64: 1, 16, 32>}, {transform_indices = @transform_1, window_bounds = array<i64: 1, 16, 32>}, {transform_indices = @transform_2, window_bounds = array<i64: 1, 16, 128>}, {transform_indices = @transform_3, window_bounds = array<i64: 1, 1, 32>}, {transform_indices = @transform_4, window_bounds = array<i64: 1, 16, 1>}, {transform_indices = @transform_5, window_bounds = array<i64: 1, 1, 16>}, {transform_indices = @transform_6, window_bounds = array<i64: 1, 16, 16>}, {transform_indices = @transform_7, window_bounds = array<i64: 1, 16, 32>}]} {
    %c0 = arith.constant 0 : index
    %c0_0 = arith.constant 0 : index
    %c0_1 = arith.constant 0 : index
    %0 = vector.load %arg2[%c0, %c0_0, %c0_1] : memref<1x16x32xbf16, #tpu.memory_space<vmem>>, vector<1x16x32xbf16>
    %1 = vector.shape_cast %0 : vector<1x16x32xbf16> to vector<16x32xbf16>
    %c0_2 = arith.constant 0 : index
    %c0_3 = arith.constant 0 : index
    %c0_4 = arith.constant 0 : index
    %2 = vector.load %arg3[%c0_2, %c0_3, %c0_4] : memref<1x16x32xbf16, #tpu.memory_space<vmem>>, vector<1x16x32xbf16>
    %3 = vector.shape_cast %2 : vector<1x16x32xbf16> to vector<16x32xbf16>
    %cst = arith.constant dense<0.000000e+00> : vector<16x16xf32>
    %4 = tpu.matmul %1, %3, %cst {dimension_numbers = #tpu.dot_dimension_numbers<[1], [1], [0], [0], [0, 0, 1, 0], [], []>} : vector<16x32xbf16>, vector<16x32xbf16>, vector<16x16xf32> -> vector<16x16xf32>
    %c0_5 = arith.constant 0 : index
    %c0_6 = arith.constant 0 : index
    %c0_7 = arith.constant 0 : index
    %5 = vector.load %arg8[%c0_5, %c0_6, %c0_7] : memref<1x16x16xf32, #tpu.memory_space<vmem>>, vector<1x16x16xf32>
    %6 = vector.shape_cast %5 : vector<1x16x16xf32> to vector<16x16xf32>
    %7 = vector.shape_cast %4 : vector<16x16xf32> to vector<1x16x16xf32>
    tpu.vector_store %arg8[%c0_5, %c0_6, %c0_7], %7 {strides = array<i32>} : memref<1x16x16xf32, #tpu.memory_space<vmem>>, vector<1x16x16xf32>,
    %c0_8 = arith.constant 0 : index
    %c0_9 = arith.constant 0 : index
    %c0_10 = arith.constant 0 : index
    %8 = vector.load %arg6[%c0_8, %c0_9, %c0_10] : memref<1x16x1xi32, #tpu.memory_space<vmem>>, vector<1x16x1xi32>
    %9 = vector.shape_cast %8 : vector<1x16x1xi32> to vector<16x1xi32>
    %c0_11 = arith.constant 0 : index
    %c0_12 = arith.constant 0 : index
    %c0_13 = arith.constant 0 : index
    %10 = vector.load %arg7[%c0_11, %c0_12, %c0_13] : memref<1x1x16xi32, #tpu.memory_space<vmem>>, vector<1x1x16xi32>
    %11 = vector.shape_cast %10 : vector<1x1x16xi32> to vector<1x16xi32>
    %12 = vector.broadcast %9 : vector<16x1xi32> to vector<16x16xi32>
    %13 = vector.broadcast %11 : vector<1x16xi32> to vector<16x16xi32>
    %14 = arith.cmpi eq, %12, %13 : vector<16x16xi32>
    %15 = arith.extui %14 : vector<16x16xi1> to vector<16x16xi32>
    %16 = arith.sitofp %15 : vector<16x16xi32> to vector<16x16xf32>
    %17 = arith.truncf %16 : vector<16x16xf32> to vector<16x16xbf16>
    %c0_14 = arith.constant 0 : index
    %c0_15 = arith.constant 0 : index
    %c0_16 = arith.constant 0 : index
    %18 = vector.load %arg4[%c0_14, %c0_15, %c0_16] : memref<1x16x128xbf16, #tpu.memory_space<vmem>>, vector<1x16x128xbf16>
    %19 = vector.shape_cast %18 : vector<1x16x128xbf16> to vector<16x128xbf16>
    %cst_17 = arith.constant dense<0.000000e+00> : vector<16x128xf32>
    %20 = tpu.matmul %17, %19, %cst_17 {dimension_numbers = #tpu.dot_dimension_numbers<[1], [0], [0], [1], [0, 0, 1, 1], [], []>} : vector<16x16xbf16>, vector<16x128xbf16>, vector<16x128xf32> -> vector<16x128xf32>
    %21 = vector.extract_strided_slice %20 {offsets = [0, 32], sizes = [16, 1], strides = [1, 1]} : vector<16x128xf32> to vector<16x1xf32>
    %cst_18 = arith.constant 9.99999997E-7 : f32
    %22 = vector.broadcast %cst_18 : f32 to vector<16x1xf32>
    %23 = arith.addf %21, %22 : vector<16x1xf32>
    %24 = tpu.reciprocal %23 {approx = true} : vector<16x1xf32> -> vector<16x1xf32>
    %25 = vector.extract_strided_slice %20 {offsets = [0, 0], sizes = [16, 32], strides = [1, 1]} : vector<16x128xf32> to vector<16x32xf32>
    %c0_19 = arith.constant 0 : index
    %c0_20 = arith.constant 0 : index
    %c0_21 = arith.constant 0 : index
    %26 = vector.load %arg5[%c0_19, %c0_20, %c0_21] : memref<1x1x32xf32, #tpu.memory_space<vmem>>, vector<1x1x32xf32>
    %27 = vector.shape_cast %26 : vector<1x1x32xf32> to vector<1x32xf32>
    %28 = vector.broadcast %27 : vector<1x32xf32> to vector<16x32xf32>
    %29 = arith.addf %25, %28 : vector<16x32xf32>
    %30 = vector.broadcast %24 : vector<16x1xf32> to vector<16x32xf32>
    %31 = arith.mulf %29, %30 : vector<16x32xf32>
    %32 = arith.truncf %31 : vector<16x32xf32> to vector<16x32xbf16>
    %c0_22 = arith.constant 0 : index
    %c0_23 = arith.constant 0 : index
    %c0_24 = arith.constant 0 : index
    %33 = vector.load %arg9[%c0_22, %c0_23, %c0_24] : memref<1x16x32xbf16, #tpu.memory_space<vmem>>, vector<1x16x32xbf16>
    %34 = vector.shape_cast %33 : vector<1x16x32xbf16> to vector<16x32xbf16>
    %35 = vector.shape_cast %32 : vector<16x32xbf16> to vector<1x16x32xbf16>
    tpu.vector_store %arg9[%c0_22, %c0_23, %c0_24], %35 {strides = array<i32>} : memref<1x16x32xbf16, #tpu.memory_space<vmem>>, vector<1x16x32xbf16>,
    return
  }
  func.func @transform_0(%arg0: i32, %arg1: i32) -> (i32, i32, i32) {
    %c0_i32 = arith.constant 0 : i32
    %c0_i32_0 = arith.constant 0 : i32
    return %arg0, %arg1, %c0_i32 : i32, i32, i32
  }
  func.func @transform_1(%arg0: i32, %arg1: i32) -> (i32, i32, i32) {
    %c0_i32 = arith.constant 0 : i32
    %c0_i32_0 = arith.constant 0 : i32
    %c0_i32_1 = arith.constant 0 : i32
    return %arg0, %c0_i32, %c0_i32_0 : i32, i32, i32
  }
  func.func @transform_2(%arg0: i32, %arg1: i32) -> (i32, i32, i32) {
    %c0_i32 = arith.constant 0 : i32
    %c0_i32_0 = arith.constant 0 : i32
    %c0_i32_1 = arith.constant 0 : i32
    return %arg0, %c0_i32, %c0_i32_0 : i32, i32, i32
  }
  func.func @transform_3(%arg0: i32, %arg1: i32) -> (i32, i32, i32) {
    %c0_i32 = arith.constant 0 : i32
    %c0_i32_0 = arith.constant 0 : i32
    %c0_i32_1 = arith.constant 0 : i32
    return %arg0, %c0_i32, %c0_i32_0 : i32, i32, i32
  }
  func.func @transform_4(%arg0: i32, %arg1: i32) -> (i32, i32, i32) {
    %c0_i32 = arith.constant 0 : i32
    %c0_i32_0 = arith.constant 0 : i32
    return %arg0, %arg1, %c0_i32 : i32, i32, i32
  }
  func.func @transform_5(%arg0: i32, %arg1: i32) -> (i32, i32, i32) {
    %c0_i32 = arith.constant 0 : i32
    %c0_i32_0 = arith.constant 0 : i32
    %c0_i32_1 = arith.constant 0 : i32
    return %arg0, %c0_i32, %c0_i32_0 : i32, i32, i32
  }
  func.func @transform_6(%arg0: i32, %arg1: i32) -> (i32, i32, i32) {
    %c0_i32 = arith.constant 0 : i32
    %c0_i32_0 = arith.constant 0 : i32
    return %arg0, %arg1, %c0_i32 : i32, i32, i32
  }
  func.func @transform_7(%arg0: i32, %arg1: i32) -> (i32, i32, i32) {
    %c0_i32 = arith.constant 0 : i32
    %c0_i32_0 = arith.constant 0 : i32
    return %arg0, %arg1, %c0_i32 : i32, i32, i32
  }
}

module attributes {stable_mosaic.version = 11 : i64} {
  func.func @_linear_kernel(%arg0: i32, %arg1: i32, %arg2: i32, %arg3: memref<32x32xbf16, #tpu.memory_space<vmem>>, %arg4: memref<32x32xbf16, #tpu.memory_space<vmem>>, %arg5: memref<1x32xf32, #tpu.memory_space<vmem>>, %arg6: memref<32x32xf32, #tpu.memory_space<vmem>>, %arg7: memref<32x32xf32, #tpu.memory_space<vmem>>) attributes {dimension_semantics = [#tpu.dimension_semantics<parallel>, #tpu.dimension_semantics<parallel>, #tpu.dimension_semantics<arbitrary>], iteration_bounds = array<i64: 1, 1, 1>, scalar_prefetch = 0 : i64, scratch_operands = 1 : i64, tpu.core_type = #tpu.core_type<tc>, window_params = [{transform_indices = @transform_0, window_bounds = array<i64: 32, 32>}, {transform_indices = @transform_1, window_bounds = array<i64: 32, 32>}, {transform_indices = @transform_2, window_bounds = array<i64: 1, 32>}, {transform_indices = @transform_3, window_bounds = array<i64: 32, 32>}]} {
    %c0_i32 = arith.constant 0 : i32
    %0 = arith.cmpi eq, %arg2, %c0_i32 : i32
    %1 = arith.extui %0 : i1 to i32
    %c0_i32_0 = arith.constant 0 : i32
    %2 = arith.cmpi ne, %1, %c0_i32_0 : i32
    scf.if %2 {
      %cst_10 = arith.constant 0.000000e+00 : f32
      %12 = vector.broadcast %cst_10 : f32 to vector<32x32xf32>
      %c0_11 = arith.constant 0 : index
      %c0_12 = arith.constant 0 : index
      %13 = vector.load %arg7[%c0_11, %c0_12] : memref<32x32xf32, #tpu.memory_space<vmem>>, vector<32x32xf32>
      tpu.vector_store %arg7[%c0_11, %c0_12], %12 {strides = array<i32>} : memref<32x32xf32, #tpu.memory_space<vmem>>, vector<32x32xf32>,
    } else {
    }
    %c0 = arith.constant 0 : index
    %c0_1 = arith.constant 0 : index
    %3 = vector.load %arg7[%c0, %c0_1] : memref<32x32xf32, #tpu.memory_space<vmem>>, vector<32x32xf32>
    %c0_2 = arith.constant 0 : index
    %c0_3 = arith.constant 0 : index
    %4 = vector.load %arg3[%c0_2, %c0_3] : memref<32x32xbf16, #tpu.memory_space<vmem>>, vector<32x32xbf16>
    %c0_4 = arith.constant 0 : index
    %c0_5 = arith.constant 0 : index
    %5 = vector.load %arg4[%c0_4, %c0_5] : memref<32x32xbf16, #tpu.memory_space<vmem>>, vector<32x32xbf16>
    %cst = arith.constant dense<0.000000e+00> : vector<32x32xf32>
    %6 = tpu.matmul %4, %5, %cst {dimension_numbers = #tpu.dot_dimension_numbers<[1], [0], [0], [1], [0, 0, 1, 1], [], []>} : vector<32x32xbf16>, vector<32x32xbf16>, vector<32x32xf32> -> vector<32x32xf32>
    %7 = arith.addf %3, %6 : vector<32x32xf32>
    %c0_6 = arith.constant 0 : index
    %c0_7 = arith.constant 0 : index
    %8 = vector.load %arg7[%c0_6, %c0_7] : memref<32x32xf32, #tpu.memory_space<vmem>>, vector<32x32xf32>
    tpu.vector_store %arg7[%c0_6, %c0_7], %7 {strides = array<i32>} : memref<32x32xf32, #tpu.memory_space<vmem>>, vector<32x32xf32>,
    %c0_i32_8 = arith.constant 0 : i32
    %9 = arith.cmpi eq, %arg2, %c0_i32_8 : i32
    %10 = arith.extui %9 : i1 to i32
    %c0_i32_9 = arith.constant 0 : i32
    %11 = arith.cmpi ne, %10, %c0_i32_9 : i32
    scf.if %11 {
      %c0_10 = arith.constant 0 : index
      %c0_11 = arith.constant 0 : index
      %12 = vector.load %arg7[%c0_10, %c0_11] : memref<32x32xf32, #tpu.memory_space<vmem>>, vector<32x32xf32>
      %c0_12 = arith.constant 0 : index
      %c0_13 = arith.constant 0 : index
      %13 = vector.load %arg5[%c0_12, %c0_13] : memref<1x32xf32, #tpu.memory_space<vmem>>, vector<1x32xf32>
      %14 = vector.broadcast %13 : vector<1x32xf32> to vector<32x32xf32>
      %15 = arith.addf %12, %14 : vector<32x32xf32>
      %c0_14 = arith.constant 0 : index
      %c0_15 = arith.constant 0 : index
      %16 = vector.load %arg6[%c0_14, %c0_15] : memref<32x32xf32, #tpu.memory_space<vmem>>, vector<32x32xf32>
      tpu.vector_store %arg6[%c0_14, %c0_15], %15 {strides = array<i32>} : memref<32x32xf32, #tpu.memory_space<vmem>>, vector<32x32xf32>,
    } else {
    }
    return
  }
  func.func @transform_0(%arg0: i32, %arg1: i32, %arg2: i32) -> (i32, i32) {
    %c0_i32 = arith.constant 0 : i32
    return %arg0, %arg2 : i32, i32
  }
  func.func @transform_1(%arg0: i32, %arg1: i32, %arg2: i32) -> (i32, i32) {
    %c0_i32 = arith.constant 0 : i32
    return %arg2, %arg1 : i32, i32
  }
  func.func @transform_2(%arg0: i32, %arg1: i32, %arg2: i32) -> (i32, i32) {
    %c0_i32 = arith.constant 0 : i32
    %c0_i32_0 = arith.constant 0 : i32
    return %c0_i32, %arg1 : i32, i32
  }
  func.func @transform_3(%arg0: i32, %arg1: i32, %arg2: i32) -> (i32, i32) {
    %c0_i32 = arith.constant 0 : i32
    return %arg0, %arg1 : i32, i32
  }
}

</mosaic_0001>

<llo_original>
// kernel: cattention_forward.3
$region0: #{cattention_forward.3}
  #allocation0 [shape = 'u32[]', space=smem, size = 0x4, offset = 0x4, fixed_abs, tag = 'smem constant byte address 0x4 - core index']
  #allocation1 [shape = 'u32[144,128]{1,0:T(1,128)}', space=vmem, size = 0x12000, scoped, tag = 'internal scratch']
  #allocation2 [shape = 'f32[32,96]{1,0:T(8,128)}', space=vmem, size = 0x4000, scoped, tag = 'scratch operand']
  %s0 = inlined_call_operand.vmem [shape: bf16[32,32], index: 0, kind: input, shape index: {}]
  %s1 = inlined_call_operand.vmem [shape: bf16[32,96], index: 1, kind: input, shape index: {}]
  %s2 = inlined_call_operand.vmem [shape: f32[1,96], index: 2, kind: input, shape index: {}]
  %s3 = inlined_call_operand.vmem [shape: bf16[32,96], index: 3, kind: output, shape index: {}]
  %s4 = sld [smem:[#allocation0]]
  $region30: #{cattention_forward.3} parent=0
    _
  %s6 = ssub.s32 1, %s4
  %s7 = scalar_select 0, %s6, %s4
  // Predicated region
  $region2: #{cattention_forward.3} parent=0 // pred_check
    _
  $region3: #{cattention_forward.3} parent=0 // pred_check_branch
    %9 = sbr.rel (0) target = $region5
  $region4: #{cattention_forward.3} parent=0 // pred_region
    _
  $region5: #{cattention_forward.3} parent=0 // pred_fallthru
    _
  // Predicated region
  $region6: #{cattention_forward.3} parent=0 // pred_check
    _
  $region7: #{cattention_forward.3} parent=0 // pred_check_branch
    %11 = sbr.rel (0) target = $region9
  $region8: #{cattention_forward.3} parent=0 // pred_region
    _
  $region9: #{cattention_forward.3} parent=0 // pred_fallthru
    _
  // Predicated region
  $region10: #{cattention_forward.3} parent=0 // pred_check
    _
  $region11: #{cattention_forward.3} parent=0 // pred_check_branch
    %13 = sbr.rel (0) target = $region13
  $region12: #{cattention_forward.3} parent=0 // pred_region
    _
  $region13: #{cattention_forward.3} parent=0 // pred_fallthru
    _
  %p15 = scmp.eq.s32.totalorder 0, 0
  // Predicated region
  $region14: #{cattention_forward.3} parent=0 // pred_check
    %p16 = pneg %p15
  $region15: #{cattention_forward.3} parent=0 // pred_check_branch
    %18 = sbr.rel (%p16) target = $region17
  $region16: #{cattention_forward.3} parent=0 // pred_region
    %vm19 = vcmask 785408
    %20 = vst.msk [vmem:[#allocation2] sm:$0xff] %vm19, 0.0
    %21 = vst.msk [vmem:[#allocation2 + $0x8] sm:$0xff] %vm19, 0.0
    %22 = vst.msk [vmem:[#allocation2 + $0x10] sm:$0xff] %vm19, 0.0
    %23 = vst.msk [vmem:[#allocation2 + $0x18] sm:$0xff] %vm19, 0.0
  $region17: #{cattention_forward.3} parent=0 // pred_fallthru
    _
  %v24 = vld [vmem:[#allocation2] sm:$0xff]
  %v25 = vld [vmem:[#allocation2 + $0x8] sm:$0xff]
  %v26 = vld [vmem:[#allocation2 + $0x10] sm:$0xff]
  %v27 = vld [vmem:[#allocation2 + $0x18] sm:$0xff]
  %v28 = vld [vmem:[%s0] sm:$0xf]
  %v29 = vld [vmem:[%s0 + $0x4] sm:$0xf]
  %v30 = vld [vmem:[%s0 + $0x8] sm:$0xf]
  %v31 = vld [vmem:[%s0 + $0xc] sm:$0xf]
  %v32 = vld [vmem:[%s1] sm:$0xf]
  %v33 = vld [vmem:[%s1 + $0x4] sm:$0xf]
  %v34 = vld [vmem:[%s1 + $0x8] sm:$0xf]
  %v35 = vld [vmem:[%s1 + $0xc] sm:$0xf]
  %v40 = vunpack.c.l.b16 %v28
  %v41 = vunpack.c.l.b16 %v29
  %v42 = vunpack.c.l.b16 %v30
  %v43 = vunpack.c.l.b16 %v31
  %v44 = vpack.c.b16 %v41, %v40
  %v45 = vpack.c.b16 %v43, %v42
  %v50 = vunpack.c.l.b16 %v32
  %v51 = vunpack.c.l.b16 %v33
  %v52 = vunpack.c.l.b16 %v34
  %v53 = vunpack.c.l.b16 %v35
  %v54 = vpack.c.b16 %v51, %v50
  %v55 = vpack.c.b16 %v53, %v52
  %vm58 = vcmask 261120
  %v60 = vsel %vm58, %v44, 0
  %v63 = vsel %vm58, %v45, 0
  %65 = vmatprep.subr.bf16.mxu0 0
  %66 = vmatpush1.bf16.msra.mxu0 %v54
  %67 = vmatprep.subr.bf16.mxu0 0
  %68 = vmatpush1.bf16.msra.mxu0 %v55
  %69 = vmatprep.subr.bf16.mxu0 0
  %70 = vmatpush1.bf16.msra.mxu0 0
  %71 = vmatprep.subr.bf16.mxu0 0
  %72 = vmatpush1.bf16.msra.mxu0 0
  %73 = vmatprep.subr.bf16.mxu0 0
  %74 = vmatpush1.bf16.msra.mxu0 0
  %75 = vmatprep.subr.bf16.mxu0 0
  %76 = vmatpush1.bf16.msra.mxu0 0
  %77 = vmatprep.subr.bf16.mxu0 0
  %78 = vmatpush1.bf16.msra.mxu0 0
  %79 = vmatprep.subr.bf16.mxu0 0
  %80 = vmatpush1.bf16.msra.mxu0 0
  %81 = vmatprep.subr.bf16.mxu0 0
  %82 = vmatpush1.bf16.msra.mxu0 0
  %83 = vmatprep.subr.bf16.mxu0 0
  %84 = vmatpush1.bf16.msra.mxu0 0
  %85 = vmatprep.subr.bf16.mxu0 0
  %86 = vmatpush1.bf16.msra.mxu0 0
  %87 = vmatprep.subr.bf16.mxu0 0
  %88 = vmatpush1.bf16.msra.mxu0 0
  %89 = vmatprep.subr.bf16.mxu0 0
  %90 = vmatpush1.bf16.msra.mxu0 0
  %91 = vmatprep.subr.bf16.mxu0 0
  %92 = vmatpush1.bf16.msra.mxu0 0
  %93 = vmatprep.subr.bf16.mxu0 0
  %94 = vmatpush1.bf16.msra.mxu0 0
  %95 = vmatprep.subr.bf16.mxu0 0
  %96 = vmatpush1.bf16.msra.mxu0 0
  %97 = vmatprep.mubr.bf16.mxu0 0
  %98 = vmatmul.mubr.bf16.gmra.mrb[0].mxu0 %v60
  %v99 = vpop.f32.mrb[0].mxu0
  %v100 = vadd.f32 0.0, %v99
  %v101 = vpop.f32.mrb[0].mxu0
  %v102 = vpop.f32.mrb[0].mxu0
  %v103 = vadd.f32 0.0, %v102
  %v104 = vpop.f32.mrb[0].mxu0
  %105 = vmatprep.mubr.bf16.mxu0 0
  %106 = vmatmul.mubr.bf16.gmra.mrb[0].mxu0 %v63
  %v107 = vpop.f32.mrb[0].mxu0
  %v108 = vadd.f32 0.0, %v107
  %v109 = vpop.f32.mrb[0].mxu0
  %v110 = vpop.f32.mrb[0].mxu0
  %v111 = vadd.f32 0.0, %v110
  %v112 = vpop.f32.mrb[0].mxu0
  %113 = vdwg.mxu0
  %v114 = vadd.f32 %v24, %v100
  %v115 = vadd.f32 %v25, %v103
  %v116 = vadd.f32 %v26, %v108
  %v117 = vadd.f32 %v27, %v111
  %vm118 = vcmask 785408
  %119 = vst.msk [vmem:[#allocation2] sm:$0xff] %vm118, %v114
  %120 = vst.msk [vmem:[#allocation2 + $0x8] sm:$0xff] %vm118, %v115
  %121 = vst.msk [vmem:[#allocation2 + $0x10] sm:$0xff] %vm118, %v116
  %122 = vst.msk [vmem:[#allocation2 + $0x18] sm:$0xff] %vm118, %v117
  // Predicated region
  $region18: #{cattention_forward.3} parent=0 // pred_check
    %p123 = pneg %p15
  $region19: #{cattention_forward.3} parent=0 // pred_check_branch
    %125 = sbr.rel (%p123) target = $region21
  $region20: #{cattention_forward.3} parent=0 // pred_region
    %v126 = vld [vmem:[#allocation2] sm:$0xff]
    %v127 = vld [vmem:[#allocation2 + $0x8] sm:$0xff]
    %v128 = vld [vmem:[#allocation2 + $0x10] sm:$0xff]
    %v129 = vld [vmem:[#allocation2 + $0x18] sm:$0xff]
    %v130 = vld [vmem:[%s2] sm:$0x1]
    %v132 = vlaneseq
    %v133 = vshrl.u32 %v132, 7
    %v134 = vsub.s32 0, %v133
    %v135 = vrot.slane %v130, %v134
    %v137 = vadd.f32 %v126, %v135
    %v138 = vadd.f32 %v127, %v135
    %v139 = vadd.f32 %v128, %v135
    %v140 = vadd.f32 %v129, %v135
    %v141 = vpack.c.bf16 %v138, %v137
    %v142 = vpack.c.bf16 %v140, %v139
    %v145 = vunpack.c.l.b16 %v141
    %v146 = vunpack.c.h.b16 %v141
    %v147 = vunpack.c.l.b16 %v142
    %v148 = vunpack.c.h.b16 %v142
    %v149 = vpack.c.b16 %v145, %v145
    %v150 = vpack.c.b16 %v146, %v146
    %v151 = vpack.c.b16 %v147, %v147
    %v152 = vpack.c.b16 %v148, %v148
    %vm157 = vcmask 781312
    %158 = vst.msk [vmem:[%s3] sm:$0xf] %vm157, %v149
    %159 = vst.msk [vmem:[%s3 + $0x4] sm:$0xf] %vm157, %v150
    %160 = vst.msk [vmem:[%s3 + $0x8] sm:$0xf] %vm157, %v151
    %161 = vst.msk [vmem:[%s3 + $0xc] sm:$0xf] %vm157, %v152
  $region21: #{cattention_forward.3} parent=0 // pred_fallthru
    _
  // Predicated region
  $region22: #{cattention_forward.3} parent=0 // pred_check
    _
  $region23: #{cattention_forward.3} parent=0 // pred_check_branch
    %163 = sbr.rel (0) target = $region25
  $region24: #{cattention_forward.3} parent=0 // pred_region
    _
  $region25: #{cattention_forward.3} parent=0 // pred_fallthru
    _
  // Predicated region
  $region26: #{cattention_forward.3} parent=0 // pred_check
    _
  $region27: #{cattention_forward.3} parent=0 // pred_check_branch
    %165 = sbr.rel (0) target = $region29
  $region28: #{cattention_forward.3} parent=0 // pred_region
    _
  $region29: #{cattention_forward.3} parent=0 // pred_fallthru
    _

// kernel: cattention_forward.4
$region0: #{cattention_forward.4}
  #allocation0 [shape = 'u32[]', space=smem, size = 0x4, offset = 0x4, fixed_abs, tag = 'smem constant byte address 0x4 - core index']
  #allocation1 [shape = 'u32[144,128]{1,0:T(1,128)}', space=vmem, size = 0x12000, scoped, tag = 'internal scratch']
  %s0 = inlined_call_operand.vmem [shape: bf16[2,16,32], index: 0, kind: input, shape index: {}]
  %s1 = inlined_call_operand.vmem [shape: bf16[2,16,32], index: 1, kind: input, shape index: {}]
  %s2 = inlined_call_operand.vmem [shape: bf16[2,16,128], index: 2, kind: input, shape index: {}]
  %s3 = inlined_call_operand.vmem [shape: f32[2,1,32], index: 3, kind: input, shape index: {}]
  %s4 = inlined_call_operand.vmem [shape: s32[2,16,1], index: 4, kind: input, shape index: {}]
  %s5 = inlined_call_operand.vmem [shape: s32[2,1,16], index: 5, kind: input, shape index: {}]
  %s6 = inlined_call_operand.hbm [shape: f32[2,16,16], index: 6, kind: output, shape index: {0}]
  %s7 = inlined_call_operand.vmem [shape: bf16[2,16,32], index: 7, kind: output, shape index: {1}]
  %8 = xla_tuple %s6, %s7
  %s9 = sld [smem:[#allocation0]]
  $region65: #{cattention_forward.4} parent=0
    _
  %s11 = ssub.s32 1, %s9
  %s12 = scalar_select 0, %s11, %s9
  $region1: #{cattention_forward.4} parent=0
    #allocation2 [shape = 'u8[16384]{0}', space=vmem, size = 0x4000, scoped, tag = 'output window, operand 0']
    #allocation3 [shape = 's32[2]{0}', space=sflag, size = 0x8, scoped, tag = 'scoped memory for cattention_forward.4']
    %13 = vsyncpa [#allocation3], 0
    %s14 = scalar_lea.sflag [#allocation3], 1
    %15 = vsyncpa %s14, 0
    loop: start=0, step=1, limit=4
    $region2: #{cattention_forward.4} parent=1 // loop_pre_header
      _
    $region3: #{cattention_forward.4} parent=1 // loop_header
      %s17 = sphi 0, %s21
      %p18 = scmp.ge.s32.totalorder %s17, 4
      %s24 = sphi 0, %s36
      %s25 = sphi 0, %s32
      %s26 = sphi 0, %s24
      %s27 = sphi 0, %s25
      %s28 = sphi 0, %s26
      %s29 = sphi 0, %s27
      %s41 = sphi 0, %s43
      %s44 = sphi 0, %s41
      %s45 = sphi 0, %s44
      %s61 = sphi 0, %s45
      %s67 = sphi 0, %s69
      %s70 = sphi 0, %s67
      %s71 = sphi 0, %s70
      %s87 = sphi 0, %s71
      %s93 = sphi 0, %s95
      %s96 = sphi 0, %s93
      %s97 = sphi 0, %s96
      %s113 = sphi 0, %s97
      %s119 = sphi 0, %s121
      %s122 = sphi 0, %s119
      %s123 = sphi 0, %s122
      %s139 = sphi 0, %s123
      %s147 = sphi 0, %s149
      %s150 = sphi 0, %s147
      %s151 = sphi 0, %s150
      %s167 = sphi 0, %s151
      %s173 = sphi 0, %s175
      %s176 = sphi 0, %s173
      %s177 = sphi 0, %s176
      %s193 = sphi 0, %s177
      %s201 = sphi 0, %s203
      %s204 = sphi 0, %s201
      %s205 = sphi 0, %s204
      %s221 = sphi 0, %s205
      %s229 = sphi 0, %s231
      %s232 = sphi 0, %s229
      %s233 = sphi 0, %s232
      %s249 = sphi 0, %s233
    $region4: #{cattention_forward.4} parent=1 // loop_header_branch
      %20 = sbr.rel (%p18) target = $region8
    $region5: #{cattention_forward.4} parent=1 // loop_body
      %s22 = ssub.s32 %s17, 1
      %s23 = ssub.s32 %s17, 2
      %s30 = sadd.s32 1, %s25
      %p31 = scmp.ge.s32.totalorder %s30, 1
      %s32 = scalar_select %p31, 0, %s30
      %s33 = sadd.s32 1, %s24
      %s34 = scalar_select %p31, %s33, %s24
      %p35 = scmp.ge.s32.totalorder %s34, 2
      %s36 = scalar_select %p35, 0, %s34
      %s37 = ssub.s32 %s24, %s36
      %s38 = ssub.s32 %s25, %s32
      %s39 = sor.u32 %s37, %s38
      %p40 = scmp.eq.s32.totalorder %s39, 0
      %s42 = sadd.s32 %s41, 1
      %s43 = scalar_select %p40, %s41, %s42
      %p46 = pneg %p40
      %p47 = scmp.eq.s32.totalorder %s17, 1
      %p48 = por %p46, %p47
      %p49 = scmp.ne.s32.totalorder %s41, %s44
      %p50 = scmp.eq.s32.totalorder %s17, 0
      %p51 = por %p49, %p50
      %p52 = scmp.ne.s32.totalorder %s41, %s44
      %p53 = scmp.eq.s32.totalorder %s22, 1
      %p54 = por %p52, %p53
      %p55 = scmp.ne.s32.totalorder %s44, %s45
      %p56 = scmp.eq.s32.totalorder %s22, 0
      %p57 = por %p55, %p56
      %p58 = scmp.ne.s32.totalorder %s44, %s45
      %p59 = scmp.eq.s32.totalorder %s23, 1
      %p60 = por %p58, %p59
      %p62 = scmp.ne.s32.totalorder %s45, %s61
      %p63 = scmp.eq.s32.totalorder %s23, 0
      %p64 = por %p62, %p63
      %s65 = ssub.s32 %s24, %s36
      %p66 = scmp.eq.s32.totalorder %s65, 0
      %s68 = sadd.s32 %s67, 1
      %s69 = scalar_select %p66, %s67, %s68
      %p72 = pneg %p66
      %p73 = scmp.eq.s32.totalorder %s17, 1
      %p74 = por %p72, %p73
      %p75 = scmp.ne.s32.totalorder %s67, %s70
      %p76 = scmp.eq.s32.totalorder %s17, 0
      %p77 = por %p75, %p76
      %p78 = scmp.ne.s32.totalorder %s67, %s70
      %p79 = scmp.eq.s32.totalorder %s22, 1
      %p80 = por %p78, %p79
      %p81 = scmp.ne.s32.totalorder %s70, %s71
      %p82 = scmp.eq.s32.totalorder %s22, 0
      %p83 = por %p81, %p82
      %p84 = scmp.ne.s32.totalorder %s70, %s71
      %p85 = scmp.eq.s32.totalorder %s23, 1
      %p86 = por %p84, %p85
      %p88 = scmp.ne.s32.totalorder %s71, %s87
      %p89 = scmp.eq.s32.totalorder %s23, 0
      %p90 = por %p88, %p89
      %s91 = ssub.s32 %s24, %s36
      %p92 = scmp.eq.s32.totalorder %s91, 0
      %s94 = sadd.s32 %s93, 1
      %s95 = scalar_select %p92, %s93, %s94
      %p98 = pneg %p92
      %p99 = scmp.eq.s32.totalorder %s17, 1
      %p100 = por %p98, %p99
      %p101 = scmp.ne.s32.totalorder %s93, %s96
      %p102 = scmp.eq.s32.totalorder %s17, 0
      %p103 = por %p101, %p102
      %p104 = scmp.ne.s32.totalorder %s93, %s96
      %p105 = scmp.eq.s32.totalorder %s22, 1
      %p106 = por %p104, %p105
      %p107 = scmp.ne.s32.totalorder %s96, %s97
      %p108 = scmp.eq.s32.totalorder %s22, 0
      %p109 = por %p107, %p108
      %p110 = scmp.ne.s32.totalorder %s96, %s97
      %p111 = scmp.eq.s32.totalorder %s23, 1
      %p112 = por %p110, %p111
      %p114 = scmp.ne.s32.totalorder %s97, %s113
      %p115 = scmp.eq.s32.totalorder %s23, 0
      %p116 = por %p114, %p115
      %s117 = ssub.s32 %s24, %s36
      %p118 = scmp.eq.s32.totalorder %s117, 0
      %s120 = sadd.s32 %s119, 1
      %s121 = scalar_select %p118, %s119, %s120
      %p124 = pneg %p118
      %p125 = scmp.eq.s32.totalorder %s17, 1
      %p126 = por %p124, %p125
      %p127 = scmp.ne.s32.totalorder %s119, %s122
      %p128 = scmp.eq.s32.totalorder %s17, 0
      %p129 = por %p127, %p128
      %p130 = scmp.ne.s32.totalorder %s119, %s122
      %p131 = scmp.eq.s32.totalorder %s22, 1
      %p132 = por %p130, %p131
      %p133 = scmp.ne.s32.totalorder %s122, %s123
      %p134 = scmp.eq.s32.totalorder %s22, 0
      %p135 = por %p133, %p134
      %p136 = scmp.ne.s32.totalorder %s122, %s123
      %p137 = scmp.eq.s32.totalorder %s23, 1
      %p138 = por %p136, %p137
      %p140 = scmp.ne.s32.totalorder %s123, %s139
      %p141 = scmp.eq.s32.totalorder %s23, 0
      %p142 = por %p140, %p141
      %s143 = ssub.s32 %s24, %s36
      %s144 = ssub.s32 %s25, %s32
      %s145 = sor.u32 %s143, %s144
      %p146 = scmp.eq.s32.totalorder %s145, 0
      %s148 = sadd.s32 %s147, 1
      %s149 = scalar_select %p146, %s147, %s148
      %p152 = pneg %p146
      %p153 = scmp.eq.s32.totalorder %s17, 1
      %p154 = por %p152, %p153
      %p155 = scmp.ne.s32.totalorder %s147, %s150
      %p156 = scmp.eq.s32.totalorder %s17, 0
      %p157 = por %p155, %p156
      %p158 = scmp.ne.s32.totalorder %s147, %s150
      %p159 = scmp.eq.s32.totalorder %s22, 1
      %p160 = por %p158, %p159
      %p161 = scmp.ne.s32.totalorder %s150, %s151
      %p162 = scmp.eq.s32.totalorder %s22, 0
      %p163 = por %p161, %p162
      %p164 = scmp.ne.s32.totalorder %s150, %s151
      %p165 = scmp.eq.s32.totalorder %s23, 1
      %p166 = por %p164, %p165
      %p168 = scmp.ne.s32.totalorder %s151, %s167
      %p169 = scmp.eq.s32.totalorder %s23, 0
      %p170 = por %p168, %p169
      %s171 = ssub.s32 %s24, %s36
      %p172 = scmp.eq.s32.totalorder %s171, 0
      %s174 = sadd.s32 %s173, 1
      %s175 = scalar_select %p172, %s173, %s174
      %p178 = pneg %p172
      %p179 = scmp.eq.s32.totalorder %s17, 1
      %p180 = por %p178, %p179
      %p181 = scmp.ne.s32.totalorder %s173, %s176
      %p182 = scmp.eq.s32.totalorder %s17, 0
      %p183 = por %p181, %p182
      %p184 = scmp.ne.s32.totalorder %s173, %s176
      %p185 = scmp.eq.s32.totalorder %s22, 1
      %p186 = por %p184, %p185
      %p187 = scmp.ne.s32.totalorder %s176, %s177
      %p188 = scmp.eq.s32.totalorder %s22, 0
      %p189 = por %p187, %p188
      %p190 = scmp.ne.s32.totalorder %s176, %s177
      %p191 = scmp.eq.s32.totalorder %s23, 1
      %p192 = por %p190, %p191
      %p194 = scmp.ne.s32.totalorder %s177, %s193
      %p195 = scmp.eq.s32.totalorder %s23, 0
      %p196 = por %p194, %p195
      %s197 = ssub.s32 %s24, %s36
      %s198 = ssub.s32 %s25, %s32
      %s199 = sor.u32 %s197, %s198
      %p200 = scmp.eq.s32.totalorder %s199, 0
      %s202 = sadd.s32 %s201, 1
      %s203 = scalar_select %p200, %s201, %s202
      %p206 = pneg %p200
      %p207 = scmp.eq.s32.totalorder %s17, 1
      %p208 = por %p206, %p207
      %p209 = scmp.ne.s32.totalorder %s201, %s204
      %p210 = scmp.eq.s32.totalorder %s17, 0
      %p211 = por %p209, %p210
      %p212 = scmp.ne.s32.totalorder %s201, %s204
      %p213 = scmp.eq.s32.totalorder %s22, 1
      %p214 = por %p212, %p213
      %p215 = scmp.ne.s32.totalorder %s204, %s205
      %p216 = scmp.eq.s32.totalorder %s22, 0
      %p217 = por %p215, %p216
      %p218 = scmp.ne.s32.totalorder %s204, %s205
      %p219 = scmp.eq.s32.totalorder %s23, 1
      %p220 = por %p218, %p219
      %p222 = scmp.ne.s32.totalorder %s205, %s221
      %p223 = scmp.eq.s32.totalorder %s23, 0
      %p224 = por %p222, %p223
      %s225 = ssub.s32 %s24, %s36
      %s226 = ssub.s32 %s25, %s32
      %s227 = sor.u32 %s225, %s226
      %p228 = scmp.eq.s32.totalorder %s227, 0
      %s230 = sadd.s32 %s229, 1
      %s231 = scalar_select %p228, %s229, %s230
      %p234 = pneg %p228
      %p235 = scmp.eq.s32.totalorder %s17, 1
      %p236 = por %p234, %p235
      %p237 = scmp.ne.s32.totalorder %s229, %s232
      %p238 = scmp.eq.s32.totalorder %s17, 0
      %p239 = por %p237, %p238
      %p240 = scmp.ne.s32.totalorder %s229, %s232
      %p241 = scmp.eq.s32.totalorder %s22, 1
      %p242 = por %p240, %p241
      %p243 = scmp.ne.s32.totalorder %s232, %s233
      %p244 = scmp.eq.s32.totalorder %s22, 0
      %p245 = por %p243, %p244
      %p246 = scmp.ne.s32.totalorder %s232, %s233
      %p247 = scmp.eq.s32.totalorder %s23, 1
      %p248 = por %p246, %p247
      %p250 = scmp.ne.s32.totalorder %s233, %s249
      %p251 = scmp.eq.s32.totalorder %s23, 0
      %p252 = por %p250, %p251
      %p253 = scmp.le.s32.totalorder 1, %s17
      %p254 = scmp.lt.s32.totalorder %s17, 3
      %p255 = pnand %p253, %p254
      %p256 = pneg %p255
      // Predicated region
      $region9: #{cattention_forward.4} parent=5 // pred_check
        _
      $region10: #{cattention_forward.4} parent=5 // pred_check_branch
        %258 = sbr.rel (%p255) target = $region12
      $region11: #{cattention_forward.4} parent=5 // pred_region
        %s259 = ssub.s32 %s17, 1
      $region12: #{cattention_forward.4} parent=5 // pred_fallthru
        _
      %p260 = scmp.lt.s32.totalorder %s17, 2
      // Predicated region
      $region13: #{cattention_forward.4} parent=5 // pred_check
        %p261 = pneg %p260
      $region14: #{cattention_forward.4} parent=5 // pred_check_branch
        %263 = sbr.rel (%p261) target = $region16
      $region15: #{cattention_forward.4} parent=5 // pred_region
        // Predicated region
        $region17: #{cattention_forward.4} parent=15 // pred_check
          %p264 = pneg %p51
        $region18: #{cattention_forward.4} parent=15 // pred_check_branch
          %266 = sbr.rel (%p264) target = $region20
        $region19: #{cattention_forward.4} parent=15 // pred_region
          %s267 = smul.u32 2, %s25
          %p268 = scmp.lt.s32.totalorder %s24, 1
          %s269 = scalar_select %p268, %s24, 1
          %p270 = scmp.lt.s32.totalorder %s267, 1
          %s271 = scalar_select %p270, %s267, 1
          %s272 = smul.addr %s269, 2
          %s273 = sadd.s32 %s271, %s272
          %s274 = smul.addr %s273, 4
          %s275 = scalar_lea.vmem %s0, %s274
          %s276 = smul.u32 2, %s25
        $region20: #{cattention_forward.4} parent=15 // pred_fallthru
          _
        // Predicated region
        $region21: #{cattention_forward.4} parent=15 // pred_check
          %p277 = pneg %p77
        $region22: #{cattention_forward.4} parent=15 // pred_check_branch
          %279 = sbr.rel (%p277) target = $region24
        $region23: #{cattention_forward.4} parent=15 // pred_region
          %p280 = scmp.lt.s32.totalorder %s24, 1
          %s281 = scalar_select %p280, %s24, 1
          %s282 = smul.addr %s281, 2
          %s283 = smul.addr %s282, 4
          %s284 = scalar_lea.vmem %s1, %s283
        $region24: #{cattention_forward.4} parent=15 // pred_fallthru
          _
        // Predicated region
        $region25: #{cattention_forward.4} parent=15 // pred_check
          %p285 = pneg %p103
        $region26: #{cattention_forward.4} parent=15 // pred_check_branch
          %287 = sbr.rel (%p285) target = $region28
        $region27: #{cattention_forward.4} parent=15 // pred_region
          %p288 = scmp.lt.s32.totalorder %s24, 1
          %s289 = scalar_select %p288, %s24, 1
          %s290 = smul.addr %s289, 2
          %s291 = smul.addr %s290, 4
          %s292 = scalar_lea.vmem %s2, %s291
        $region28: #{cattention_forward.4} parent=15 // pred_fallthru
          _
        // Predicated region
        $region29: #{cattention_forward.4} parent=15 // pred_check
          %p293 = pneg %p129
        $region30: #{cattention_forward.4} parent=15 // pred_check_branch
          %295 = sbr.rel (%p293) target = $region32
        $region31: #{cattention_forward.4} parent=15 // pred_region
          %p296 = scmp.lt.s32.totalorder %s24, 1
          %s297 = scalar_select %p296, %s24, 1
          %s298 = scalar_lea.vmem %s3, %s297
        $region32: #{cattention_forward.4} parent=15 // pred_fallthru
          _
        // Predicated region
        $region33: #{cattention_forward.4} parent=15 // pred_check
          %p299 = pneg %p157
        $region34: #{cattention_forward.4} parent=15 // pred_check_branch
          %301 = sbr.rel (%p299) target = $region36
        $region35: #{cattention_forward.4} parent=15 // pred_region
          %s302 = smul.u32 2, %s25
          %p303 = scmp.lt.s32.totalorder %s24, 1
          %s304 = scalar_select %p303, %s24, 1
          %p305 = scmp.lt.s32.totalorder %s302, 1
          %s306 = scalar_select %p305, %s302, 1
          %s307 = smul.addr %s304, 2
          %s308 = sadd.s32 %s306, %s307
          %s309 = smul.addr %s308, 8
          %s310 = scalar_lea.vmem %s4, %s309
          %s311 = smul.u32 2, %s25
        $region36: #{cattention_forward.4} parent=15 // pred_fallthru
          _
        // Predicated region
        $region37: #{cattention_forward.4} parent=15 // pred_check
          %p312 = pneg %p183
        $region38: #{cattention_forward.4} parent=15 // pred_check_branch
          %314 = sbr.rel (%p312) target = $region40
        $region39: #{cattention_forward.4} parent=15 // pred_region
          %p315 = scmp.lt.s32.totalorder %s24, 1
          %s316 = scalar_select %p315, %s24, 1
          %s317 = scalar_lea.vmem %s5, %s316
        $region40: #{cattention_forward.4} parent=15 // pred_fallthru
          _
      $region16: #{cattention_forward.4} parent=5 // pred_fallthru
        _
      %p318 = scmp.le.s32.totalorder 1, %s17
      %p319 = scmp.lt.s32.totalorder %s17, 3
      %p320 = pnand %p318, %p319
      %p321 = pneg %p320
      // Predicated region
      $region41: #{cattention_forward.4} parent=5 // pred_check
        _
      $region42: #{cattention_forward.4} parent=5 // pred_check_branch
        %323 = sbr.rel (%p320) target = $region44
      $region43: #{cattention_forward.4} parent=5 // pred_region
        %s324 = ssub.s32 %s17, 1
        %s325 = smul.u32 2, %s27
        %p326 = scmp.lt.s32.totalorder %s26, 1
        %s327 = scalar_select %p326, %s26, 1
        %p328 = scmp.lt.s32.totalorder %s325, 1
        %s329 = scalar_select %p328, %s325, 1
        %s330 = smul.addr %s327, 2
        %s331 = sadd.s32 %s329, %s330
        %s332 = smul.addr %s331, 4
        %s333 = scalar_lea.vmem %s0, %s332
        %p334 = pneg %p57
        %p335 = pneg %p54
        %p336 = scmp.lt.s32.totalorder %s26, 1
        %s337 = scalar_select %p336, %s26, 1
        %s338 = smul.addr %s337, 2
        %s339 = smul.addr %s338, 4
        %s340 = scalar_lea.vmem %s1, %s339
        %p341 = pneg %p83
        %p342 = pneg %p80
        %p343 = scmp.lt.s32.totalorder %s26, 1
        %s344 = scalar_select %p343, %s26, 1
        %s345 = smul.addr %s344, 2
        %s346 = smul.addr %s345, 4
        %s347 = scalar_lea.vmem %s2, %s346
        %p348 = pneg %p109
        %p349 = pneg %p106
        %p350 = scmp.lt.s32.totalorder %s26, 1
        %s351 = scalar_select %p350, %s26, 1
        %s352 = scalar_lea.vmem %s3, %s351
        %p353 = pneg %p135
        %p354 = pneg %p132
        %s355 = smul.u32 2, %s27
        %p356 = scmp.lt.s32.totalorder %s26, 1
        %s357 = scalar_select %p356, %s26, 1
        %p358 = scmp.lt.s32.totalorder %s355, 1
        %s359 = scalar_select %p358, %s355, 1
        %s360 = smul.addr %s357, 2
        %s361 = sadd.s32 %s359, %s360
        %s362 = smul.addr %s361, 8
        %s363 = scalar_lea.vmem %s4, %s362
        %p364 = pneg %p163
        %p365 = pneg %p160
        %p366 = scmp.lt.s32.totalorder %s26, 1
        %s367 = scalar_select %p366, %s26, 1
        %s368 = scalar_lea.vmem %s5, %s367
        %p369 = pneg %p189
        %p370 = pneg %p186
        %p371 = pneg %p217
        %p372 = pneg %p214
        %s373 = sand.u32 %s204, 1
        %s374 = scalar_lea.sflag [#allocation3], %s373
        %s375 = sand.u32 %s204, 1
        %s376 = smul.addr %s375, 16
        %s377 = scalar_lea.vmem [#allocation2], %s376
        %p378 = pneg %p245
        %p379 = pneg %p242
        %s380 = smul.u32 2, %s27
        %p381 = scmp.lt.s32.totalorder %s26, 1
        %s382 = scalar_select %p381, %s26, 1
        %p383 = scmp.lt.s32.totalorder %s380, 1
        %s384 = scalar_select %p383, %s380, 1
        %s385 = smul.addr %s382, 2
        %s386 = sadd.s32 %s384, %s385
        %s387 = smul.addr %s386, 4
        %s388 = scalar_lea.vmem %s7, %s387
        %s389 = smul.u32 2, %s27
        %p390 = scmp.lt.s32.totalorder %s26, 1
        %s391 = scalar_select %p390, %s26, 1
        %p392 = scmp.lt.s32.totalorder %s389, 1
        %s393 = scalar_select %p392, %s389, 1
        %s394 = smul.addr %s391, 2
        %s395 = sadd.s32 %s393, %s394
        %s396 = smul.addr %s395, 4
        %s397 = scalar_lea.vmem %s0, %s396
        %s398 = smul.u32 2, %s27
        %p399 = scmp.lt.s32.totalorder %s26, 1
        %s400 = scalar_select %p399, %s26, 1
        %s401 = smul.addr %s400, 2
        %s402 = smul.addr %s401, 4
        %s403 = scalar_lea.vmem %s1, %s402
        %p404 = scmp.lt.s32.totalorder %s26, 1
        %s405 = scalar_select %p404, %s26, 1
        %s406 = smul.addr %s405, 2
        %s407 = smul.addr %s406, 4
        %s408 = scalar_lea.vmem %s2, %s407
        %p409 = scmp.lt.s32.totalorder %s26, 1
        %s410 = scalar_select %p409, %s26, 1
        %s411 = scalar_lea.vmem %s3, %s410
        %s412 = smul.u32 2, %s27
        %p413 = scmp.lt.s32.totalorder %s26, 1
        %s414 = scalar_select %p413, %s26, 1
        %p415 = scmp.lt.s32.totalorder %s412, 1
        %s416 = scalar_select %p415, %s412, 1
        %s417 = smul.addr %s414, 2
        %s418 = sadd.s32 %s416, %s417
        %s419 = smul.addr %s418, 8
        %s420 = scalar_lea.vmem %s4, %s419
        %s421 = smul.u32 2, %s27
        %p422 = scmp.lt.s32.totalorder %s26, 1
        %s423 = scalar_select %p422, %s26, 1
        %s424 = scalar_lea.vmem %s5, %s423
        %s425 = smul.u32 2, %s27
        %s426 = smul.u32 2, %s27
        %p427 = scmp.lt.s32.totalorder %s26, 1
        %s428 = scalar_select %p427, %s26, 1
        %p429 = scmp.lt.s32.totalorder %s426, 1
        %s430 = scalar_select %p429, %s426, 1
        %s431 = smul.addr %s428, 2
        %s432 = sadd.s32 %s430, %s431
        %s433 = smul.addr %s432, 4
        %s434 = scalar_lea.vmem %s7, %s433
        %s435 = smul.u32 2, %s27
        %v437 = vld [vmem:[%s397] sm:$0xf]
        %v438 = vld [vmem:[%s397 + $0x4] sm:$0xf]
        %v439 = vld [vmem:[%s403] sm:$0xf]
        %v440 = vld [vmem:[%s403 + $0x4] sm:$0xf]
        %v443 = vunpack.c.l.b16 %v437
        %v444 = vunpack.c.l.b16 %v438
        %v445 = vpack.c.b16 %v444, %v443
        %v448 = vunpack.c.l.b16 %v439
        %v449 = vunpack.c.l.b16 %v440
        %v450 = vpack.c.b16 %v449, %v448
        %vm451 = vcmask 261120
        %v453 = vsel %vm451, %v445, 0
        %v456 = vsel %vm451, %v450, 0
        %458 = vmatprep.subr.bf16.mxu0 0
        %459 = vmatpush1.bf16.xpose.msra.mxu0 %v456
        %460 = vmatprep.subr.bf16.mxu0 0
        %461 = vmatpush1.bf16.xpose.msra.mxu0 0
        %462 = vmatprep.subr.bf16.mxu0 0
        %463 = vmatpush1.bf16.xpose.msra.mxu0 0
        %464 = vmatprep.subr.bf16.mxu0 0
        %465 = vmatpush1.bf16.xpose.msra.mxu0 0
        %466 = vmatprep.subr.bf16.mxu0 0
        %467 = vmatpush1.bf16.xpose.msra.mxu0 0
        %468 = vmatprep.subr.bf16.mxu0 0
        %469 = vmatpush1.bf16.xpose.msra.mxu0 0
        %470 = vmatprep.subr.bf16.mxu0 0
        %471 = vmatpush1.bf16.xpose.msra.mxu0 0
        %472 = vmatprep.subr.bf16.mxu0 0
        %473 = vmatpush1.bf16.xpose.msra.mxu0 0
        %474 = vmatprep.subr.bf16.mxu0 0
        %475 = vmatpush1.bf16.xpose.msra.mxu0 0
        %476 = vmatprep.subr.bf16.mxu0 0
        %477 = vmatpush1.bf16.xpose.msra.mxu0 0
        %478 = vmatprep.subr.bf16.mxu0 0
        %479 = vmatpush1.bf16.xpose.msra.mxu0 0
        %480 = vmatprep.subr.bf16.mxu0 0
        %481 = vmatpush1.bf16.xpose.msra.mxu0 0
        %482 = vmatprep.subr.bf16.mxu0 0
        %483 = vmatpush1.bf16.xpose.msra.mxu0 0
        %484 = vmatprep.subr.bf16.mxu0 0
        %485 = vmatpush1.bf16.xpose.msra.mxu0 0
        %486 = vmatprep.subr.bf16.mxu0 0
        %487 = vmatpush1.bf16.xpose.msra.mxu0 0
        %488 = vmatprep.subr.bf16.mxu0 0
        %489 = vmatpush1.bf16.xpose.msra.mxu0 0
        %490 = vmatprep.mubr.bf16.mxu0 0
        %491 = vmatmul.mubr.bf16.gmra.mrb[0].mxu0 %v453
        %v492 = vpop.f32.mrb[0].mxu0
        %v493 = vadd.f32 0.0, %v492
        %v494 = vpop.f32.mrb[0].mxu0
        %v495 = vpop.f32.mrb[0].mxu0
        %v496 = vadd.f32 0.0, %v495
        %v497 = vpop.f32.mrb[0].mxu0
        %498 = vdwg.mxu0
        %vm499 = vcmask 130048
        %500 = vst.msk [vmem:[%s377] sm:$0xff] %vm499, %v493
        %501 = vst.msk [vmem:[%s377 + $0x8] sm:$0xff] %vm499, %v496
        %v502 = vld [vmem:[%s420] sm:$0xff]
        %v503 = vld [vmem:[%s420 + $0x8] sm:$0xff]
        %v504 = vld [vmem:[%s424] sm:$0x1]
        %505 = vset.pattern.permute.xlu0 0
        %506 = vperm.xlu0 %505, %v502
        %v507 = vpop.permute.xlu0 %506
        %508 = vset.pattern.permute.xlu0 0
        %509 = vperm.xlu0 %508, %v503
        %v510 = vpop.permute.xlu0 %509
        %v511 = vlaneseq
        %v512 = vshrl.u32 %v511, 7
        %v513 = vsub.s32 0, %v512
        %v514 = vrot.slane %v504, %v513
        %vm515 = vcmp.eq.s32.totalorder %v507, %v514
        %vm516 = vcmp.eq.s32.totalorder %v510, %v514
        %v517 = vsel %vm515, 1, 0
        %v518 = vsel %vm516, 1, 0
        %v519 = vcvt.s32.f32 %v517
        %v520 = vcvt.s32.f32 %v518
        %v521 = vpack.c.bf16 %v520, %v519
        %v522 = vld [vmem:[%s408] sm:$0xf]
        %v523 = vld [vmem:[%s408 + $0x4] sm:$0xf]
        %v526 = vunpack.c.l.b16 %v522
        %v527 = vunpack.c.l.b16 %v523
        %v528 = vpack.c.b16 %v527, %v526
        %v531 = vsel %vm499, %v521, 0
        %533 = vmatprep.subr.bf16.mxu0 0
        %534 = vmatpush1.bf16.msra.mxu0 %v528
        %535 = vmatprep.subr.bf16.mxu0 0
        %536 = vmatpush1.bf16.msra.mxu0 0
        %537 = vmatprep.subr.bf16.mxu0 0
        %538 = vmatpush1.bf16.msra.mxu0 0
        %539 = vmatprep.subr.bf16.mxu0 0
        %540 = vmatpush1.bf16.msra.mxu0 0
        %541 = vmatprep.subr.bf16.mxu0 0
        %542 = vmatpush1.bf16.msra.mxu0 0
        %543 = vmatprep.subr.bf16.mxu0 0
        %544 = vmatpush1.bf16.msra.mxu0 0
        %545 = vmatprep.subr.bf16.mxu0 0
        %546 = vmatpush1.bf16.msra.mxu0 0
        %547 = vmatprep.subr.bf16.mxu0 0
        %548 = vmatpush1.bf16.msra.mxu0 0
        %549 = vmatprep.subr.bf16.mxu0 0
        %550 = vmatpush1.bf16.msra.mxu0 0
        %551 = vmatprep.subr.bf16.mxu0 0
        %552 = vmatpush1.bf16.msra.mxu0 0
        %553 = vmatprep.subr.bf16.mxu0 0
        %554 = vmatpush1.bf16.msra.mxu0 0
        %555 = vmatprep.subr.bf16.mxu0 0
        %556 = vmatpush1.bf16.msra.mxu0 0
        %557 = vmatprep.subr.bf16.mxu0 0
        %558 = vmatpush1.bf16.msra.mxu0 0
        %559 = vmatprep.subr.bf16.mxu0 0
        %560 = vmatpush1.bf16.msra.mxu0 0
        %561 = vmatprep.subr.bf16.mxu0 0
        %562 = vmatpush1.bf16.msra.mxu0 0
        %563 = vmatprep.subr.bf16.mxu0 0
        %564 = vmatpush1.bf16.msra.mxu0 0
        %565 = vmatprep.mubr.bf16.mxu0 0
        %566 = vmatmul.mubr.bf16.gmra.mrb[0].mxu0 %v531
        %v567 = vpop.f32.mrb[0].mxu0
        %v568 = vadd.f32 0.0, %v567
        %v569 = vpop.f32.mrb[0].mxu0
        %v570 = vpop.f32.mrb[0].mxu0
        %v571 = vadd.f32 0.0, %v570
        %v572 = vpop.f32.mrb[0].mxu0
        %573 = vdwg.mxu0
        %v574 = vadd.f32 %v568, 1e-06
        %v575 = vadd.f32 %v571, 1e-06
        %v576 = vrcp.pop %v574
        %v577 = vrcp.pop %v575
        %v578 = vld [vmem:[%s411] sm:$0x1]
        %v580 = vlaneseq
        %v581 = vshrl.u32 %v580, 7
        %v582 = vsub.s32 0, %v581
        %v583 = vrot.slane %v578, %v582
        %v585 = vadd.f32 %v568, %v583
        %v586 = vadd.f32 %v571, %v583
        %588 = vset.pattern.permute.xlu0 32
        %589 = vperm.xlu0 %588, %v576
        %v590 = vpop.permute.xlu0 %589
        %593 = vset.pattern.permute.xlu0 32
        %594 = vperm.xlu0 %593, %v577
        %v595 = vpop.permute.xlu0 %594
        %v597 = vmul.f32 %v585, %v590
        %v598 = vmul.f32 %v586, %v595
        %v599 = vpack.c.bf16 %v598, %v597
        %v601 = vunpack.c.l.b16 %v599
        %v602 = vunpack.c.h.b16 %v599
        %v603 = vpack.c.b16 %v601, %v601
        %v604 = vpack.c.b16 %v602, %v602
        %vm607 = vcmask 257024
        %608 = vst.msk [vmem:[%s434] sm:$0xf] %vm607, %v603
        %609 = vst.msk [vmem:[%s434 + $0x4] sm:$0xf] %vm607, %v604
        %s610 = sand.u32 %s204, 1
        %s611 = scalar_lea.sflag [#allocation3], %s610
        %s612 = sand.u32 %s204, 1
        %s613 = smul.addr %s612, 16
        %s614 = scalar_lea.vmem [#allocation2], %s613
        %s615 = smul.u32 2, %s27
        %p616 = scmp.lt.s32.totalorder %s26, 1
        %s617 = scalar_select %p616, %s26, 1
        %p618 = scmp.lt.s32.totalorder %s615, 1
        %s619 = scalar_select %p618, %s615, 1
        %s620 = smul.addr %s617, 2
        %s621 = sadd.s32 %s619, %s620
        %s622 = smul.addr %s621, 4
        %s623 = scalar_lea.vmem %s7, %s622
        // Predicated region
        $region45: #{cattention_forward.4} parent=43 // pred_check
          %p624 = pneg %p214
        $region46: #{cattention_forward.4} parent=43 // pred_check_branch
          %626 = sbr.rel (%p624) target = $region48
        $region47: #{cattention_forward.4} parent=43 // pred_region
          %s627 = smul.u32 2, %s27
          %s629 = ssub.s32 256, 256
          %630 = vsyncadd %s611, %s629
          %s631 = smul.addr %s26, 2
          %s632 = sadd.s32 %s627, %s631
          %s633 = smul.addr %s632, 128
          %s634 = scalar_lea.hbm %s6, %s633
          %s635 = sshll.u32 %s614, 4
          %s636 = int_to_ptr.vmem [resolvable:$true] %s635
          %641 = dma.vmem_to_hbm [thread:$0]  %s636, 256, %s634, %s611, 128, 128, 8
        $region48: #{cattention_forward.4} parent=43 // pred_fallthru
          _
        // Predicated region
        $region49: #{cattention_forward.4} parent=43 // pred_check
          %p642 = pneg %p242
        $region50: #{cattention_forward.4} parent=43 // pred_check_branch
          %644 = sbr.rel (%p642) target = $region52
        $region51: #{cattention_forward.4} parent=43 // pred_region
          %s645 = smul.u32 2, %s27
        $region52: #{cattention_forward.4} parent=43 // pred_fallthru
          _
      $region44: #{cattention_forward.4} parent=5 // pred_fallthru
        _
      %p646 = scmp.le.s32.totalorder 2, %s17
      // Predicated region
      $region53: #{cattention_forward.4} parent=5 // pred_check
        %p647 = pneg %p646
      $region54: #{cattention_forward.4} parent=5 // pred_check_branch
        %649 = sbr.rel (%p647) target = $region56
      $region55: #{cattention_forward.4} parent=5 // pred_region
        %s650 = ssub.s32 %s17, 2
        // Predicated region
        $region57: #{cattention_forward.4} parent=55 // pred_check
          %p651 = pneg %p220
        $region58: #{cattention_forward.4} parent=55 // pred_check_branch
          %653 = sbr.rel (%p651) target = $region60
        $region59: #{cattention_forward.4} parent=55 // pred_region
          %s654 = sand.u32 %s205, 1
          %s655 = scalar_lea.sflag [#allocation3], %s654
          %s656 = sand.u32 %s205, 1
          %s657 = smul.addr %s656, 16
          %s658 = scalar_lea.vmem [#allocation2], %s657
          %659 = dma.done %s655, 256
        $region60: #{cattention_forward.4} parent=55 // pred_fallthru
          _
        // Predicated region
        $region61: #{cattention_forward.4} parent=55 // pred_check
          %p660 = pneg %p248
        $region62: #{cattention_forward.4} parent=55 // pred_check_branch
          %662 = sbr.rel (%p660) target = $region64
        $region63: #{cattention_forward.4} parent=55 // pred_region
          %s663 = smul.u32 2, %s29
          %p664 = scmp.lt.s32.totalorder %s28, 1
          %s665 = scalar_select %p664, %s28, 1
          %p666 = scmp.lt.s32.totalorder %s663, 1
          %s667 = scalar_select %p666, %s663, 1
          %s668 = smul.addr %s665, 2
          %s669 = sadd.s32 %s667, %s668
          %s670 = smul.addr %s669, 4
          %s671 = scalar_lea.vmem %s7, %s670
        $region64: #{cattention_forward.4} parent=55 // pred_fallthru
          _
      $region56: #{cattention_forward.4} parent=5 // pred_fallthru
        _
    $region6: #{cattention_forward.4} parent=1 // loop_footer
      %s21 = sadd.s32 1, %s17
    $region7: #{cattention_forward.4} parent=1 // loop_footer_branch
      %16 = sbr.rel target = $region3
    $region8: #{cattention_forward.4} parent=1 // loop_exit
      _
    %672 = vsyncpa [#allocation3], 1
    %s673 = scalar_lea.sflag [#allocation3], 1
    %674 = vsyncpa %s673, 1

// kernel: cattention_forward.5
$region0: #{cattention_forward.5}
  #allocation0 [shape = 'u32[]', space=smem, size = 0x4, offset = 0x4, fixed_abs, tag = 'smem constant byte address 0x4 - core index']
  #allocation1 [shape = 'u32[144,128]{1,0:T(1,128)}', space=vmem, size = 0x12000, scoped, tag = 'internal scratch']
  #allocation2 [shape = 'f32[32,32]{1,0:T(8,128)}', space=vmem, size = 0x4000, scoped, tag = 'scratch operand']
  %s0 = inlined_call_operand.vmem [shape: bf16[32,32], index: 0, kind: input, shape index: {}]
  %s1 = inlined_call_operand.vmem [shape: bf16[32,32], index: 1, kind: input, shape index: {}]
  %s2 = inlined_call_operand.vmem [shape: f32[1,32], index: 2, kind: input, shape index: {}]
  %s3 = inlined_call_operand.hbm [shape: f32[32,32], index: 3, kind: output, shape index: {}]
  %s4 = sld [smem:[#allocation0]]
  $region30: #{cattention_forward.5} parent=0
    _
  %s6 = ssub.s32 1, %s4
  %s7 = scalar_select 0, %s6, %s4
  $region1: #{cattention_forward.5} parent=0
    #allocation3 [shape = 'u8[16384]{0}', space=vmem, size = 0x4000, scoped, tag = 'output window, operand 0, single buffered']
    #allocation4 [shape = 's32[1]{0}', space=sflag, size = 0x4, scoped, tag = 'scoped memory for cattention_forward.5']
    %8 = vsyncpa [#allocation4], 0
    // Predicated region
    $region2: #{cattention_forward.5} parent=1 // pred_check
      _
    $region3: #{cattention_forward.5} parent=1 // pred_check_branch
      %10 = sbr.rel (0) target = $region5
    $region4: #{cattention_forward.5} parent=1 // pred_region
      _
    $region5: #{cattention_forward.5} parent=1 // pred_fallthru
      _
    // Predicated region
    $region6: #{cattention_forward.5} parent=1 // pred_check
      _
    $region7: #{cattention_forward.5} parent=1 // pred_check_branch
      %12 = sbr.rel (0) target = $region9
    $region8: #{cattention_forward.5} parent=1 // pred_region
      _
    $region9: #{cattention_forward.5} parent=1 // pred_fallthru
      _
    // Predicated region
    $region10: #{cattention_forward.5} parent=1 // pred_check
      _
    $region11: #{cattention_forward.5} parent=1 // pred_check_branch
      %14 = sbr.rel (0) target = $region13
    $region12: #{cattention_forward.5} parent=1 // pred_region
      _
    $region13: #{cattention_forward.5} parent=1 // pred_fallthru
      _
    %p16 = scmp.eq.s32.totalorder 0, 0
    // Predicated region
    $region14: #{cattention_forward.5} parent=1 // pred_check
      %p17 = pneg %p16
    $region15: #{cattention_forward.5} parent=1 // pred_check_branch
      %19 = sbr.rel (%p17) target = $region17
    $region16: #{cattention_forward.5} parent=1 // pred_region
      %vm20 = vcmask 261120
      %21 = vst.msk [vmem:[#allocation2] sm:$0xff] %vm20, 0.0
      %22 = vst.msk [vmem:[#allocation2 + $0x8] sm:$0xff] %vm20, 0.0
      %23 = vst.msk [vmem:[#allocation2 + $0x10] sm:$0xff] %vm20, 0.0
      %24 = vst.msk [vmem:[#allocation2 + $0x18] sm:$0xff] %vm20, 0.0
    $region17: #{cattention_forward.5} parent=1 // pred_fallthru
      _
    %v25 = vld [vmem:[#allocation2] sm:$0xff]
    %v26 = vld [vmem:[#allocation2 + $0x8] sm:$0xff]
    %v27 = vld [vmem:[#allocation2 + $0x10] sm:$0xff]
    %v28 = vld [vmem:[#allocation2 + $0x18] sm:$0xff]
    %v29 = vld [vmem:[%s0] sm:$0xf]
    %v30 = vld [vmem:[%s0 + $0x4] sm:$0xf]
    %v31 = vld [vmem:[%s0 + $0x8] sm:$0xf]
    %v32 = vld [vmem:[%s0 + $0xc] sm:$0xf]
    %v33 = vld [vmem:[%s1] sm:$0xf]
    %v34 = vld [vmem:[%s1 + $0x4] sm:$0xf]
    %v35 = vld [vmem:[%s1 + $0x8] sm:$0xf]
    %v36 = vld [vmem:[%s1 + $0xc] sm:$0xf]
    %v41 = vunpack.c.l.b16 %v29
    %v42 = vunpack.c.l.b16 %v30
    %v43 = vunpack.c.l.b16 %v31
    %v44 = vunpack.c.l.b16 %v32
    %v45 = vpack.c.b16 %v42, %v41
    %v46 = vpack.c.b16 %v44, %v43
    %v51 = vunpack.c.l.b16 %v33
    %v52 = vunpack.c.l.b16 %v34
    %v53 = vunpack.c.l.b16 %v35
    %v54 = vunpack.c.l.b16 %v36
    %v55 = vpack.c.b16 %v52, %v51
    %v56 = vpack.c.b16 %v54, %v53
    %vm59 = vcmask 261120
    %v61 = vsel %vm59, %v45, 0
    %v64 = vsel %vm59, %v46, 0
    %66 = vmatprep.subr.bf16.mxu0 0
    %67 = vmatpush1.bf16.msra.mxu0 %v55
    %68 = vmatprep.subr.bf16.mxu0 0
    %69 = vmatpush1.bf16.msra.mxu0 %v56
    %70 = vmatprep.subr.bf16.mxu0 0
    %71 = vmatpush1.bf16.msra.mxu0 0
    %72 = vmatprep.subr.bf16.mxu0 0
    %73 = vmatpush1.bf16.msra.mxu0 0
    %74 = vmatprep.subr.bf16.mxu0 0
    %75 = vmatpush1.bf16.msra.mxu0 0
    %76 = vmatprep.subr.bf16.mxu0 0
    %77 = vmatpush1.bf16.msra.mxu0 0
    %78 = vmatprep.subr.bf16.mxu0 0
    %79 = vmatpush1.bf16.msra.mxu0 0
    %80 = vmatprep.subr.bf16.mxu0 0
    %81 = vmatpush1.bf16.msra.mxu0 0
    %82 = vmatprep.subr.bf16.mxu0 0
    %83 = vmatpush1.bf16.msra.mxu0 0
    %84 = vmatprep.subr.bf16.mxu0 0
    %85 = vmatpush1.bf16.msra.mxu0 0
    %86 = vmatprep.subr.bf16.mxu0 0
    %87 = vmatpush1.bf16.msra.mxu0 0
    %88 = vmatprep.subr.bf16.mxu0 0
    %89 = vmatpush1.bf16.msra.mxu0 0
    %90 = vmatprep.subr.bf16.mxu0 0
    %91 = vmatpush1.bf16.msra.mxu0 0
    %92 = vmatprep.subr.bf16.mxu0 0
    %93 = vmatpush1.bf16.msra.mxu0 0
    %94 = vmatprep.subr.bf16.mxu0 0
    %95 = vmatpush1.bf16.msra.mxu0 0
    %96 = vmatprep.subr.bf16.mxu0 0
    %97 = vmatpush1.bf16.msra.mxu0 0
    %98 = vmatprep.mubr.bf16.mxu0 0
    %99 = vmatmul.mubr.bf16.gmra.mrb[0].mxu0 %v61
    %v100 = vpop.f32.mrb[0].mxu0
    %v101 = vadd.f32 0.0, %v100
    %v102 = vpop.f32.mrb[0].mxu0
    %v103 = vpop.f32.mrb[0].mxu0
    %v104 = vadd.f32 0.0, %v103
    %v105 = vpop.f32.mrb[0].mxu0
    %106 = vmatprep.mubr.bf16.mxu0 0
    %107 = vmatmul.mubr.bf16.gmra.mrb[0].mxu0 %v64
    %v108 = vpop.f32.mrb[0].mxu0
    %v109 = vadd.f32 0.0, %v108
    %v110 = vpop.f32.mrb[0].mxu0
    %v111 = vpop.f32.mrb[0].mxu0
    %v112 = vadd.f32 0.0, %v111
    %v113 = vpop.f32.mrb[0].mxu0
    %114 = vdwg.mxu0
    %v115 = vadd.f32 %v25, %v101
    %v116 = vadd.f32 %v26, %v104
    %v117 = vadd.f32 %v27, %v109
    %v118 = vadd.f32 %v28, %v112
    %119 = vst.msk [vmem:[#allocation2] sm:$0xff] %vm59, %v115
    %120 = vst.msk [vmem:[#allocation2 + $0x8] sm:$0xff] %vm59, %v116
    %121 = vst.msk [vmem:[#allocation2 + $0x10] sm:$0xff] %vm59, %v117
    %122 = vst.msk [vmem:[#allocation2 + $0x18] sm:$0xff] %vm59, %v118
    // Predicated region
    $region18: #{cattention_forward.5} parent=1 // pred_check
      %p123 = pneg %p16
    $region19: #{cattention_forward.5} parent=1 // pred_check_branch
      %125 = sbr.rel (%p123) target = $region21
    $region20: #{cattention_forward.5} parent=1 // pred_region
      %v126 = vld [vmem:[#allocation2] sm:$0xff]
      %v127 = vld [vmem:[#allocation2 + $0x8] sm:$0xff]
      %v128 = vld [vmem:[#allocation2 + $0x10] sm:$0xff]
      %v129 = vld [vmem:[#allocation2 + $0x18] sm:$0xff]
      %v130 = vld [vmem:[%s2] sm:$0x1]
      %v132 = vlaneseq
      %v133 = vshrl.u32 %v132, 7
      %v134 = vsub.s32 0, %v133
      %v135 = vrot.slane %v130, %v134
      %v137 = vadd.f32 %v126, %v135
      %v138 = vadd.f32 %v127, %v135
      %v139 = vadd.f32 %v128, %v135
      %v140 = vadd.f32 %v129, %v135
      %141 = vst.msk [vmem:[#allocation3] sm:$0xff] %vm59, %v137
      %142 = vst.msk [vmem:[#allocation3 + $0x8] sm:$0xff] %vm59, %v138
      %143 = vst.msk [vmem:[#allocation3 + $0x10] sm:$0xff] %vm59, %v139
      %144 = vst.msk [vmem:[#allocation3 + $0x18] sm:$0xff] %vm59, %v140
    $region21: #{cattention_forward.5} parent=1 // pred_fallthru
      _
    // Predicated region
    $region22: #{cattention_forward.5} parent=1 // pred_check
      _
    $region23: #{cattention_forward.5} parent=1 // pred_check_branch
      %146 = sbr.rel (0) target = $region25
    $region24: #{cattention_forward.5} parent=1 // pred_region
      %s148 = ssub.s32 512, 512
      %149 = vsyncadd [#allocation4], %s148
      %s150 = sshll.u32 [#allocation3], 4
      %s151 = int_to_ptr.vmem [resolvable:$true] %s150
      %156 = dma.vmem_to_hbm [thread:$0]  %s151, 512, %s3, [#allocation4], 128, 128, 8
    $region25: #{cattention_forward.5} parent=1 // pred_fallthru
      _
    // Predicated region
    $region26: #{cattention_forward.5} parent=1 // pred_check
      _
    $region27: #{cattention_forward.5} parent=1 // pred_check_branch
      %158 = sbr.rel (0) target = $region29
    $region28: #{cattention_forward.5} parent=1 // pred_region
      %159 = dma.done [#allocation4], 512
    $region29: #{cattention_forward.5} parent=1 // pred_fallthru
      _
    %160 = vsyncpa [#allocation4], 1

</llo_original>
